<compile_context>
chip_gen: v5e
topology: v5e:2x2
jax: 0.10.0
libtpu: 0.0.40
codegen_flags: <defaults>
</compile_context>

<pallas_src>
import jax
import jax.numpy as jnp
from jax.experimental import pallas as pl
from jax.experimental.pallas import tpu as pltpu


def _conv1x1_vpu_kernel(x_ref, wt_ref, o_ref):
    """Dense VPU channel reduction (small C_out).

    x_ref : (C, T)  VMEM  -- spatial tile lane-dense, channels on sublanes
    wt_ref: (C, O)  VMEM  -- weight, channel-major (transposed once on host)
    o_ref : (O, T)  VMEM  -- lane-dense output tile
    """
    n_out = o_ref.shape[0]
    for o in range(n_out):  # static unroll; O is tiny on this path
        col = wt_ref[:, o:o + 1].astype(jnp.float32)              # (C, 1)
        # x * col promotes to f32 -> accumulation in f32 (parity with the MXU
        # path's preferred_element_type), even for bf16 activations.
        row = jnp.sum(x_ref[...] * col, axis=0, keepdims=True)    # (1, T) f32
        o_ref[o:o + 1, :] = row.astype(o_ref.dtype)               # direct store


def _conv1x1_mxu_kernel(x_ref, w_ref, o_ref):
    """MXU path for larger channel counts.

    x_ref: (C, T) VMEM;  w_ref: (O, C) VMEM;  o_ref: (O, T) VMEM
    """
    o_ref[...] = jnp.dot(
        w_ref[...], x_ref[...], preferred_element_type=jnp.float32
    ).astype(o_ref.dtype)


def _vmem_budget_bytes():
    cap = 64 * 1024 * 1024  # conservative default = v7x physical VMEM
    try:
        info = pltpu.get_tpu_info()
        cap = int(getattr(info, "vmem_capacity_bytes", cap))
    except Exception:
        pass
    # Scoped-VMEM request: ~3/4 of physical, capped at 96 MiB.
    #   v5e/v6e (128 MiB physical) -> 96 MiB;  v7x (64 MiB) -> 48 MiB.
    return min(cap * 3 // 4, 96 * 1024 * 1024)


def conv1x1(x_nchw, weight_oc, *, max_tile_pixels=131072,
            fallback_bytes=2 * 1024 * 1024):
    """x_nchw: (N, C_in, H, W); weight_oc: (C_out, C_in). Returns NCHW output."""
    N, C, H, W = x_nchw.shape
    O, C_w = weight_oc.shape
    if C_w != C:
        raise ValueError(f"weight has {C_w} input channels but x has {C}")

    HW = H * W
    itemsize = jnp.dtype(x_nchw.dtype).itemsize

    # Tiny-problem fallback: launch/reshape overhead dominates any kernel win.
    if fallback_bytes and N * C * HW * itemsize < fallback_bytes:
        return jnp.einsum("nchw,oc->nohw", x_nchw, weight_oc).astype(x_nchw.dtype)

    # Dispatch: dense VPU reduction stays hidden under DMA for the LPIPS shapes
    # (O=1, C<=256 incl. the VGG heads up to 256); bigger problems use the MXU
    # where its rows are well utilised.
    use_vpu = (O <= 2) and (C <= 256)

    # ---- spatial tile size --------------------------------------------------
    vmem_limit = _vmem_budget_bytes()
    budget = int(vmem_limit * 0.85)           # headroom for Mosaic scratch
    bytes_per_px = 2 * (C + O) * itemsize     # double-buffered input + output
    if use_vpu:
        bytes_per_px += 4 * C                 # in-kernel f32 product temp
    t_cap = max(128, min(max_tile_pixels, budget // bytes_per_px) // 128 * 128)

    x3 = x_nchw.reshape(N, C, HW)             # contiguous flatten, no transpose
    HW_work, padded = HW, False
    if HW % 128 == 0:
        t_hw = min(t_cap, HW)                 # no padding; ragged last tile OK
    elif HW <= t_cap:
        t_hw = HW                             # single full-extent spatial tile
    else:
        # Rare: large, non-128-divisible spatial extent -> pad once to the lane
        # multiple (tile last dim must be 128-divisible or the full extent).
        HW_work = pl.cdiv(HW, 128) * 128
        x3 = jnp.pad(x3, ((0, 0), (0, 0), (0, HW_work - HW)))
        padded = True
        t_hw = min(t_cap, HW_work)

    # v7x megacore: keep enough grid steps to feed both TensorCores, but never
    # shrink a tile below 1024 pixels (per-step overhead ~0.35 us).
    if t_hw % 128 == 0:
        min_steps = 8
        if N * pl.cdiv(HW_work, t_hw) < min_steps:
            want = pl.cdiv(min_steps, N)
            t_alt = max(1024, pl.cdiv(pl.cdiv(HW_work, want), 128) * 128)
            if t_alt < t_hw:
                t_hw = t_alt
    n_t = pl.cdiv(HW_work, t_hw)
    # Ragged last tile is numerically safe without padding: there is no
    # reduction across the spatial axis, OOB input lanes only produce OOB
    # output lanes, and Pallas writes back just the in-bounds region.

    if use_vpu:
        kernel = _conv1x1_vpu_kernel
        w_arg = weight_oc.T                                   # (C, O)
        w_spec = pl.BlockSpec((C, O), lambda n, t: (0, 0))    # resident in VMEM
    else:
        kernel = _conv1x1_mxu_kernel
        w_arg = weight_oc                                     # (O, C)
        w_spec = pl.BlockSpec((O, C), lambda n, t: (0, 0))

    cost = pl.CostEstimate(
        flops=2 * N * HW_work * C * O,
        transcendentals=0,
        bytes_accessed=itemsize * N * HW_work * (C + O)
        + jnp.dtype(weight_oc.dtype).itemsize * C * O,
    )

    out3 = pl.pallas_call(
        kernel,
        out_shape=jax.ShapeDtypeStruct((N, O, HW_work), x_nchw.dtype),
        grid_spec=pltpu.PrefetchScalarGridSpec(
            num_scalar_prefetch=0,
            grid=(N, n_t),
            in_specs=[
                pl.BlockSpec((None, C, t_hw), lambda n, t: (n, 0, t)),
                w_spec,
            ],
            out_specs=pl.BlockSpec((None, O, t_hw), lambda n, t: (n, 0, t)),
        ),
        compiler_params=pltpu.CompilerParams(
            dimension_semantics=("parallel", "parallel"),
            vmem_limit_bytes=vmem_limit,
        ),
        cost_estimate=cost,
    )(x3, w_arg)

    if padded:
        out3 = out3[:, :, :HW]
    return out3.reshape(N, O, H, W)


if __name__ == "__main__":
    key = jax.random.PRNGKey(0)
    kx, kw = jax.random.split(key)

    # Shapes implied by the module (LPIPS demo head).
    N, C_in, H, W = 2, 4, 16, 16
    C_out = 1
    x = jax.random.normal(kx, (N, C_in, H, W), dtype=jnp.float32)
    bound = 1.0 / (C_in ** 0.5)
    weight = jax.random.uniform(
        kw, (C_out, C_in), dtype=jnp.float32, minval=-bound, maxval=bound)

    # Exercise the Pallas kernel (disable the tiny-problem einsum fallback).
    out = conv1x1(x, weight, fallback_bytes=0)
    jax.block_until_ready(out)
    ref = jnp.einsum("nchw,oc->nohw", x, weight)  # eval-mode dropout = identity
    assert out.shape == (N, C_out, H, W)
    assert jnp.allclose(out, ref, atol=1e-5, rtol=1e-5)

    # Tiny-problem fallback path (default threshold).
    out_fb = conv1x1(x, weight)
    assert jnp.allclose(out_fb, ref, atol=1e-5, rtol=1e-5)

    # Dense VPU path with C >= 8 and a ragged last spatial tile (HW % t_hw != 0).
    k2x, k2w = jax.random.split(jax.random.PRNGKey(1))
    x2 = jax.random.normal(k2x, (2, 64, 32, 32), dtype=jnp.float32)
    w2 = jax.random.normal(k2w, (1, 64), dtype=jnp.float32) * 0.05
    out2 = conv1x1(x2, w2, fallback_bytes=0, max_tile_pixels=384)
    ref2 = jnp.einsum("nchw,oc->nohw", x2, w2)
    assert jnp.allclose(out2, ref2, atol=1e-4, rtol=1e-4)

    # Non-128-multiple spatial extent -> single full-extent tile, no padding.
    x3_ = jax.random.normal(jax.random.PRNGKey(2), (2, 16, 24, 24), jnp.float32)
    w3_ = jax.random.normal(jax.random.PRNGKey(3), (1, 16), jnp.float32) * 0.1
    out3_ = conv1x1(x3_, w3_, fallback_bytes=0)
    ref3_ = jnp.einsum("nchw,oc->nohw", x3_, w3_)
    assert jnp.allclose(out3_, ref3_, atol=1e-4, rtol=1e-4)

    # MXU path (larger out_channels).
    x4 = jax.random.normal(jax.random.PRNGKey(4), (2, 32, 16, 16), jnp.float32)
    w4 = jax.random.normal(jax.random.PRNGKey(5), (8, 32), jnp.float32) * 0.1
    out4 = conv1x1(x4, w4, fallback_bytes=0)
    ref4 = jnp.einsum("nchw,oc->nohw", x4, w4)
    assert jnp.allclose(out4, ref4, atol=1e-4, rtol=1e-4)

    print("KERNEL_OK")
</pallas_src>

<mosaic_0001>
module attributes {stable_mosaic.version = 11 : i64} {
  func.func @_conv1x1_vpu_kernel(%arg0: i32, %arg1: i32, %arg2: memref<1x4x256xf32, #tpu.memory_space<vmem>>, %arg3: memref<4x1xf32, #tpu.memory_space<vmem>>, %arg4: memref<1x1x256xf32, #tpu.memory_space<vmem>>) attributes {dimension_semantics = [#tpu.dimension_semantics<parallel>, #tpu.dimension_semantics<parallel>], iteration_bounds = array<i64: 2, 1>, scalar_prefetch = 0 : i64, scratch_operands = 0 : i64, tpu.core_type = #tpu.core_type<tc>, window_params = [{transform_indices = @transform_0, window_bounds = array<i64: 1, 4, 256>}, {pipeline_mode = #tpu.pipeline_mode<synchronous>, transform_indices = @transform_1, window_bounds = array<i64: 4, 1>}, {transform_indices = @transform_2, window_bounds = array<i64: 1, 1, 256>}]} {
    %c0 = arith.constant 0 : index
    %c0_0 = arith.constant 0 : index
    %0 = vector.load %arg3[%c0, %c0_0] : memref<4x1xf32, #tpu.memory_space<vmem>>, vector<4x1xf32>
    %c0_1 = arith.constant 0 : index
    %c0_2 = arith.constant 0 : index
    %c0_3 = arith.constant 0 : index
    %1 = vector.load %arg2[%c0_1, %c0_2, %c0_3] : memref<1x4x256xf32, #tpu.memory_space<vmem>>, vector<1x4x256xf32>
    %2 = vector.shape_cast %1 : vector<1x4x256xf32> to vector<4x256xf32>
    %3 = vector.broadcast %0 : vector<4x1xf32> to vector<4x256xf32>
    %4 = arith.mulf %2, %3 : vector<4x256xf32>
    %cst = arith.constant dense<0.000000e+00> : vector<256xf32>
    %5 = vector.multi_reduction <add>, %4, %cst [0] : vector<4x256xf32> to vector<256xf32>
    %6 = vector.shape_cast %5 : vector<256xf32> to vector<1x256xf32>
    %c0_4 = arith.constant 0 : index
    %c0_5 = arith.constant 0 : index
    %c0_6 = arith.constant 0 : index
    %7 = vector.load %arg4[%c0_4, %c0_5, %c0_6] : memref<1x1x256xf32, #tpu.memory_space<vmem>>, vector<1x1x256xf32>
    %8 = vector.shape_cast %7 : vector<1x1x256xf32> to vector<1x256xf32>
    %9 = vector.shape_cast %6 : vector<1x256xf32> to vector<1x1x256xf32>
    tpu.vector_store %arg4[%c0_4, %c0_5, %c0_6], %9 {strides = array<i32>} : memref<1x1x256xf32, #tpu.memory_space<vmem>>, vector<1x1x256xf32>,
    return
  }
  func.func @transform_0(%arg0: i32, %arg1: i32) -> (i32, i32, i32) {
    %c0_i32 = arith.constant 0 : i32
    %c0_i32_0 = arith.constant 0 : i32
    return %arg0, %c0_i32, %arg1 : i32, i32, i32
  }
  func.func @transform_1(%arg0: i32, %arg1: i32) -> (i32, i32) {
    %c0_i32 = arith.constant 0 : i32
    %c0_i32_0 = arith.constant 0 : i32
    %c0_i32_1 = arith.constant 0 : i32
    return %c0_i32, %c0_i32_0 : i32, i32
  }
  func.func @transform_2(%arg0: i32, %arg1: i32) -> (i32, i32, i32) {
    %c0_i32 = arith.constant 0 : i32
    %c0_i32_0 = arith.constant 0 : i32
    return %arg0, %c0_i32, %arg1 : i32, i32, i32
  }
}

</mosaic_0001>

<llo_original>
// kernel: tpu_custom_call.1
$region0: #{tpu_custom_call.1}
  #allocation0 [shape = 'u32[]', space=smem, size = 0x4, offset = 0x4, fixed_abs, tag = 'smem constant byte address 0x4 - core index']
  #allocation1 [shape = 'u32[72,128]{1,0:T(1,128)}', space=vmem, size = 0x9000, scoped, tag = 'internal scratch']
  %s0 = inlined_call_operand.hbm [shape: f32[2,4,256], index: 0, kind: input, shape index: {}]
  %s1 = inlined_call_operand.vmem [shape: f32[4,1], index: 1, kind: input, shape index: {}]
  %s2 = inlined_call_operand.hbm [shape: f32[2,1,256], index: 2, kind: output, shape index: {}]
  %s3 = sld [smem:[#allocation0]]
  $region45: #{tpu_custom_call.1} parent=0
    _
  %s5 = ssub.s32 1, %s3
  %s6 = scalar_select 0, %s5, %s3
  $region1: #{tpu_custom_call.1} parent=0
    #allocation2 [shape = 'u8[8192]{0}', space=vmem, size = 0x2000, scoped, tag = 'input window, operand 0']
    #allocation3 [shape = 's32[2]{0}', space=sflag, size = 0x8, scoped, tag = 'scoped memory for tpu_custom_call.1']
    #allocation4 [shape = 's32[2]{0}', space=sflag, size = 0x8, scoped, tag = 'scoped memory for tpu_custom_call.1']
    #allocation5 [shape = 'u8[2048]{0}', space=vmem, size = 0x800, scoped, tag = 'output window, operand 0']
    %7 = vsyncpa [#allocation3], 0
    %s8 = scalar_lea.sflag [#allocation3], 1
    %9 = vsyncpa %s8, 0
    %10 = vsyncpa [#allocation4], 0
    %s11 = scalar_lea.sflag [#allocation4], 1
    %12 = vsyncpa %s11, 0
    loop: start=0, step=1, limit=4
    $region2: #{tpu_custom_call.1} parent=1 // loop_pre_header
      _
    $region3: #{tpu_custom_call.1} parent=1 // loop_header
      %s14 = sphi 0, %s18
      %p15 = scmp.ge.s32.totalorder %s14, 4
      %s21 = sphi 0, %s33
      %s22 = sphi 0, %s29
      %s23 = sphi 0, %s21
      %s24 = sphi 0, %s22
      %s25 = sphi 0, %s23
      %s26 = sphi 0, %s24
      %s38 = sphi 0, %s40
      %s41 = sphi 0, %s38
      %s42 = sphi 0, %s41
      %s58 = sphi 0, %s42
      %s62 = sphi 0, %s62
      %s64 = sphi 0, %s62
      %s65 = sphi 0, %s64
      %s79 = sphi 0, %s65
      %s87 = sphi 0, %s89
      %s90 = sphi 0, %s87
      %s91 = sphi 0, %s90
      %s107 = sphi 0, %s91
    $region4: #{tpu_custom_call.1} parent=1 // loop_header_branch
      %17 = sbr.rel (%p15) target = $region8
    $region5: #{tpu_custom_call.1} parent=1 // loop_body
      %s19 = ssub.s32 %s14, 1
      %s20 = ssub.s32 %s14, 2
      %s27 = sadd.s32 1, %s22
      %p28 = scmp.ge.s32.totalorder %s27, 1
      %s29 = scalar_select %p28, 0, %s27
      %s30 = sadd.s32 1, %s21
      %s31 = scalar_select %p28, %s30, %s21
      %p32 = scmp.ge.s32.totalorder %s31, 2
      %s33 = scalar_select %p32, 0, %s31
      %s34 = ssub.s32 %s21, %s33
      %s35 = ssub.s32 %s22, %s29
      %s36 = sor.u32 %s34, %s35
      %p37 = scmp.eq.s32.totalorder %s36, 0
      %s39 = sadd.s32 %s38, 1
      %s40 = scalar_select %p37, %s38, %s39
      %p43 = pneg %p37
      %p44 = scmp.eq.s32.totalorder %s14, 1
      %p45 = por %p43, %p44
      %p46 = scmp.ne.s32.totalorder %s38, %s41
      %p47 = scmp.eq.s32.totalorder %s14, 0
      %p48 = por %p46, %p47
      %p49 = scmp.ne.s32.totalorder %s38, %s41
      %p50 = scmp.eq.s32.totalorder %s19, 1
      %p51 = por %p49, %p50
      %p52 = scmp.ne.s32.totalorder %s41, %s42
      %p53 = scmp.eq.s32.totalorder %s19, 0
      %p54 = por %p52, %p53
      %p55 = scmp.ne.s32.totalorder %s41, %s42
      %p56 = scmp.eq.s32.totalorder %s20, 1
      %p57 = por %p55, %p56
      %p59 = scmp.ne.s32.totalorder %s42, %s58
      %p60 = scmp.eq.s32.totalorder %s20, 0
      %p61 = por %p59, %p60
      %s63 = sadd.s32 %s62, 1
      %p66 = scmp.eq.s32.totalorder %s14, 1
      %p67 = scmp.ne.s32.totalorder %s62, %s64
      %p68 = scmp.eq.s32.totalorder %s14, 0
      %p69 = por %p67, %p68
      %p70 = scmp.ne.s32.totalorder %s62, %s64
      %p71 = scmp.eq.s32.totalorder %s19, 1
      %p72 = por %p70, %p71
      %p73 = scmp.ne.s32.totalorder %s64, %s65
      %p74 = scmp.eq.s32.totalorder %s19, 0
      %p75 = por %p73, %p74
      %p76 = scmp.ne.s32.totalorder %s64, %s65
      %p77 = scmp.eq.s32.totalorder %s20, 1
      %p78 = por %p76, %p77
      %p80 = scmp.ne.s32.totalorder %s65, %s79
      %p81 = scmp.eq.s32.totalorder %s20, 0
      %p82 = por %p80, %p81
      %s83 = ssub.s32 %s21, %s33
      %s84 = ssub.s32 %s22, %s29
      %s85 = sor.u32 %s83, %s84
      %p86 = scmp.eq.s32.totalorder %s85, 0
      %s88 = sadd.s32 %s87, 1
      %s89 = scalar_select %p86, %s87, %s88
      %p92 = pneg %p86
      %p93 = scmp.eq.s32.totalorder %s14, 1
      %p94 = por %p92, %p93
      %p95 = scmp.ne.s32.totalorder %s87, %s90
      %p96 = scmp.eq.s32.totalorder %s14, 0
      %p97 = por %p95, %p96
      %p98 = scmp.ne.s32.totalorder %s87, %s90
      %p99 = scmp.eq.s32.totalorder %s19, 1
      %p100 = por %p98, %p99
      %p101 = scmp.ne.s32.totalorder %s90, %s91
      %p102 = scmp.eq.s32.totalorder %s19, 0
      %p103 = por %p101, %p102
      %p104 = scmp.ne.s32.totalorder %s90, %s91
      %p105 = scmp.eq.s32.totalorder %s20, 1
      %p106 = por %p104, %p105
      %p108 = scmp.ne.s32.totalorder %s91, %s107
      %p109 = scmp.eq.s32.totalorder %s20, 0
      %p110 = por %p108, %p109
      %p111 = scmp.le.s32.totalorder 1, %s14
      %p112 = scmp.lt.s32.totalorder %s14, 3
      %p113 = pnand %p111, %p112
      %p114 = pneg %p113
      // Predicated region
      $region9: #{tpu_custom_call.1} parent=5 // pred_check
        _
      $region10: #{tpu_custom_call.1} parent=5 // pred_check_branch
        %116 = sbr.rel (%p113) target = $region12
      $region11: #{tpu_custom_call.1} parent=5 // pred_region
        %s117 = ssub.s32 %s14, 1
        // Predicated region
        $region13: #{tpu_custom_call.1} parent=11 // pred_check
          %p118 = pneg %p75
        $region14: #{tpu_custom_call.1} parent=11 // pred_check_branch
          %120 = sbr.rel (%p118) target = $region16
        $region15: #{tpu_custom_call.1} parent=11 // pred_region
          _
        $region16: #{tpu_custom_call.1} parent=11 // pred_fallthru
          _
      $region12: #{tpu_custom_call.1} parent=5 // pred_fallthru
        _
      %p121 = scmp.lt.s32.totalorder %s14, 2
      // Predicated region
      $region17: #{tpu_custom_call.1} parent=5 // pred_check
        %p122 = pneg %p121
      $region18: #{tpu_custom_call.1} parent=5 // pred_check_branch
        %124 = sbr.rel (%p122) target = $region20
      $region19: #{tpu_custom_call.1} parent=5 // pred_region
        // Predicated region
        $region21: #{tpu_custom_call.1} parent=19 // pred_check
          %p125 = pneg %p48
        $region22: #{tpu_custom_call.1} parent=19 // pred_check_branch
          %127 = sbr.rel (%p125) target = $region24
        $region23: #{tpu_custom_call.1} parent=19 // pred_region
          %s128 = sand.u32 %s38, 1
          %s129 = scalar_lea.sflag [#allocation3], %s128
          %s130 = sand.u32 %s38, 1
          %s131 = smul.addr %s130, 8
          %s132 = scalar_lea.vmem [#allocation2], %s131
          %s133 = smul.u32 2, %s22
          %135 = vsyncadd %s129, 0
          %s136 = smul.addr %s21, 2
          %s137 = sadd.s32 %s133, %s136
          %s138 = smul.addr %s137, 4
          %s139 = scalar_lea.hbm %s0, %s138
          %s141 = sshll.u32 %s139, 4
          %s142 = int_to_ptr.hbm [resolvable:$true] %s141
          %s143 = sshll.u32 %s132, 4
          %s144 = int_to_ptr.vmem [resolvable:$true] %s143
          %146 = dma.hbm_to_vmem [thread:$0]  %s142, 128, %s144, %s129
        $region24: #{tpu_custom_call.1} parent=19 // pred_fallthru
          _
      $region20: #{tpu_custom_call.1} parent=5 // pred_fallthru
        _
      %p147 = scmp.le.s32.totalorder 1, %s14
      %p148 = scmp.lt.s32.totalorder %s14, 3
      %p149 = pnand %p147, %p148
      %p150 = pneg %p149
      // Predicated region
      $region25: #{tpu_custom_call.1} parent=5 // pred_check
        _
      $region26: #{tpu_custom_call.1} parent=5 // pred_check_branch
        %152 = sbr.rel (%p149) target = $region28
      $region27: #{tpu_custom_call.1} parent=5 // pred_region
        %s153 = ssub.s32 %s14, 1
        %s154 = sand.u32 %s41, 1
        %s155 = scalar_lea.sflag [#allocation3], %s154
        %s156 = sand.u32 %s41, 1
        %s157 = smul.addr %s156, 8
        %s158 = scalar_lea.vmem [#allocation2], %s157
        // Predicated region
        $region29: #{tpu_custom_call.1} parent=27 // pred_check
          %p159 = pneg %p54
        $region30: #{tpu_custom_call.1} parent=27 // pred_check_branch
          %161 = sbr.rel (%p159) target = $region32
        $region31: #{tpu_custom_call.1} parent=27 // pred_region
          %163 = dma.done %s155, 128
        $region32: #{tpu_custom_call.1} parent=27 // pred_fallthru
          _
        %s164 = sand.u32 %s41, 1
        %s165 = scalar_lea.sflag [#allocation3], %s164
        %s166 = sand.u32 %s41, 1
        %s167 = smul.addr %s166, 8
        %s168 = scalar_lea.vmem [#allocation2], %s167
        %p169 = pneg %p54
        %p170 = pneg %p51
        %p171 = pneg %p75
        %p172 = pneg %p72
        %p173 = pneg %p103
        %p174 = pneg %p100
        %s175 = sand.u32 %s90, 1
        %s176 = scalar_lea.sflag [#allocation4], %s175
        %s177 = sand.u32 %s90, 1
        %s178 = smul.addr %s177, 2
        %s179 = scalar_lea.vmem [#allocation5], %s178
        %s180 = smul.u32 2, %s24
        %s181 = smul.u32 2, %s24
        %v182 = vld [vmem:[%s1] sm:$0xf]
        %v183 = vld [vmem:[%s158] sm:$0xff]
        %185 = vset.pattern.permute.xlu0 0
        %186 = vperm.xlu0 %185, %v182
        %v187 = vpop.permute.xlu0 %186
        %v189 = vunpack.c.l.s4 839922192
        %v190 = vunpack.c.0.s8 %v189
        %v191 = vperm.slane %v187, %v190
        %v193 = vmul.f32 %v183, %v191
        %195 = vst [vmem:[#allocation1] ss:$2 sm:$0xff] %v193
        %v196 = vld.sshfl [vmem:[#allocation1] sm:$0xff pattern:$0x75316420]
        %v197 = vld.sshfl [vmem:[#allocation1 + $0x8] sm:$0xff pattern:$0x75316420]
        %vm200 = vcmask 1043456
        %v201 = vsel %vm200, %v196, 0.0
        %v202 = vrot.slane %v201, 4
        %v203 = vadd.f32 %v201, %v202
        %v204 = vrot.slane %v203, 2
        %v205 = vadd.f32 %v203, %v204
        %v206 = vrot.slane %v205, 1
        %v207 = vadd.f32 %v205, %v206
        %v208 = vsel %vm200, %v197, 0.0
        %v209 = vrot.slane %v208, 4
        %v210 = vadd.f32 %v208, %v209
        %v211 = vrot.slane %v210, 2
        %v212 = vadd.f32 %v210, %v211
        %v213 = vrot.slane %v212, 1
        %v214 = vadd.f32 %v212, %v213
        %v217 = vrot.slane %v214, 7
        %vm218 = vcmask 1040384
        %v219 = vsel %vm218, %v207, %v217
        %v221 = vlaneseq
        %vm222 = vcmp.ge.s32.totalorder %v221, 0
        %vm223 = vcmp.lt.s32.totalorder %v221, 256
        %vm224 = vmand %vm222, %vm223
        %225 = vst.msk [vmem:[%s179] sm:$0x3] %vm224, %v219
        %s226 = sand.u32 %s90, 1
        %s227 = scalar_lea.sflag [#allocation4], %s226
        %s228 = sand.u32 %s90, 1
        %s229 = smul.addr %s228, 2
        %s230 = scalar_lea.vmem [#allocation5], %s229
        // Predicated region
        $region33: #{tpu_custom_call.1} parent=27 // pred_check
          %p231 = pneg %p100
        $region34: #{tpu_custom_call.1} parent=27 // pred_check_branch
          %233 = sbr.rel (%p231) target = $region36
        $region35: #{tpu_custom_call.1} parent=27 // pred_region
          %s234 = smul.u32 2, %s24
          %236 = vsyncadd %s227, 0
          %s237 = smul.addr %s23, 2
          %s238 = sadd.s32 %s234, %s237
          %s239 = scalar_lea.hbm %s2, %s238
          %s241 = sshll.u32 %s230, 4
          %s242 = int_to_ptr.vmem [resolvable:$true] %s241
          %s243 = sshll.u32 %s239, 4
          %s244 = int_to_ptr.hbm [resolvable:$true] %s243
          %246 = dma.vmem_to_hbm [thread:$0]  %s242, 32, %s244, %s227
        $region36: #{tpu_custom_call.1} parent=27 // pred_fallthru
          _
      $region28: #{tpu_custom_call.1} parent=5 // pred_fallthru
        _
      %p247 = scmp.le.s32.totalorder 2, %s14
      // Predicated region
      $region37: #{tpu_custom_call.1} parent=5 // pred_check
        %p248 = pneg %p247
      $region38: #{tpu_custom_call.1} parent=5 // pred_check_branch
        %250 = sbr.rel (%p248) target = $region40
      $region39: #{tpu_custom_call.1} parent=5 // pred_region
        %s251 = ssub.s32 %s14, 2
        // Predicated region
        $region41: #{tpu_custom_call.1} parent=39 // pred_check
          %p252 = pneg %p106
        $region42: #{tpu_custom_call.1} parent=39 // pred_check_branch
          %254 = sbr.rel (%p252) target = $region44
        $region43: #{tpu_custom_call.1} parent=39 // pred_region
          %s255 = sand.u32 %s91, 1
          %s256 = scalar_lea.sflag [#allocation4], %s255
          %s257 = sand.u32 %s91, 1
          %s258 = smul.addr %s257, 2
          %s259 = scalar_lea.vmem [#allocation5], %s258
          %261 = dma.done %s256, 32
        $region44: #{tpu_custom_call.1} parent=39 // pred_fallthru
          _
      $region40: #{tpu_custom_call.1} parent=5 // pred_fallthru
        _
    $region6: #{tpu_custom_call.1} parent=1 // loop_footer
      %s18 = sadd.s32 1, %s14
    $region7: #{tpu_custom_call.1} parent=1 // loop_footer_branch
      %13 = sbr.rel target = $region3
    $region8: #{tpu_custom_call.1} parent=1 // loop_exit
      _
    %262 = vsyncpa [#allocation3], 1
    %s263 = scalar_lea.sflag [#allocation3], 1
    %264 = vsyncpa %s263, 1
    %265 = vsyncpa [#allocation4], 1
    %s266 = scalar_lea.sflag [#allocation4], 1
    %267 = vsyncpa %s266, 1

</llo_original>
